<compile_context>
chip_gen: v5e
topology: v5e:2x2
jax: 0.10.0
libtpu: 0.0.40
codegen_flags: <defaults>
</compile_context>

<pallas_src>
import functools

import jax
import jax.numpy as jnp
import numpy as np
from jax.experimental import pallas as pl
from jax.experimental.pallas import tpu as pltpu


def _round_up(x, m):
    return ((x + m - 1) // m) * m


def _choose_tile_hw(num_classes, hw, budget_bytes=12 * 1024 * 1024):
    """Largest pixel tile (multiple of 128) whose double-buffered VMEM
    footprint stays under `budget_bytes` on every TPU generation."""
    c_pad = _round_up(max(num_classes, 8), 8)      # pred tile sublane padding
    # pred tile + label tile (1 row padded to 8 sublanes), f32, double-buffered
    per_pixel_bytes = (c_pad + 8) * 4 * 2
    tile = max(128, (budget_bytes // per_pixel_bytes) // 128 * 128)
    return min(tile, _round_up(hw, 128))


def _dsc_stats_kernel(pred_ref, label_ref, stats_ref, *, hw_true, tile_hw,
                      nt_inner, need_mask):
    k = pl.program_id(2)

    @pl.when(k == 0)
    def _():
        stats_ref[...] = jnp.zeros_like(stats_ref)

    logits = pred_ref[0].astype(jnp.float32)  # (C, T) f32 (cast in-kernel)
    label = label_ref[0]                      # (1, T) i32
    C, T = logits.shape

    if need_mask:
        # Tail tiles read unspecified (possibly NaN/inf) lanes past H*W.
        # Sanitise them at the source so every downstream value is finite,
        # then zero their contribution to every statistic.
        s = pl.program_id(0)
        base = (s * nt_inner + k) * tile_hw
        pix = base + jax.lax.broadcasted_iota(jnp.int32, (1, T), 1)
        valid = pix < hw_true                                # (1, T) bool
        valid_f = valid.astype(jnp.float32)
        logits = jnp.where(valid, logits, 0.0)               # finite everywhere
        label = jnp.where(valid, label, -1)                  # never matches iota

    # numerically-stable softmax / log-softmax over the class axis (sublanes)
    m = jnp.max(logits, axis=0, keepdims=True)               # (1, T)
    shifted = logits - m
    e = jnp.exp(shifted)
    denom = jnp.sum(e, axis=0, keepdims=True)                # (1, T)
    # (1, T) reciprocal + broadcast multiply instead of a (C, T) divide.
    inv_den = 1.0 / denom                                    # (1, T)
    probs = e * inv_den                                      # (C, T)
    logden = jnp.log(denom)                                  # (1, T)

    # one-hot target built in-kernel; padded labels are -1 -> all-zero column
    cls = jax.lax.broadcasted_iota(jnp.int32, (C, T), 0)
    onehot = (cls == label).astype(jnp.float32)              # (C, T)

    if need_mask:
        # only the prob-sum needs an explicit mask (onehot is already zero
        # in invalid columns, and all values there are finite)
        probs = probs * valid_f

    inter = jnp.sum(probs * onehot, axis=1, keepdims=True)            # (C, 1)
    psum = jnp.sum(probs, axis=1, keepdims=True)                      # (C, 1)
    tsum = jnp.sum(onehot, axis=1, keepdims=True)                     # (C, 1)
    ce = jnp.sum(onehot * (logden - shifted), axis=1, keepdims=True)  # (C, 1)

    tile_stats = jnp.concatenate([inter, psum, tsum, ce], axis=1)     # (C, 4)
    stats_ref[...] += tile_stats.reshape(1, 1, C, 4)


def _dsc_stats(pred, label, tile_hw=None):
    """Per-(batch, class) sufficient statistics via a tiled Pallas reduction.

    Returns (inter, psum, tsum, ce), each of shape (B, C)."""
    B, C = pred.shape[0], pred.shape[1]
    HW = 1
    for d in pred.shape[2:]:
        HW *= int(d)

    if tile_hw is None:
        tile_hw = _choose_tile_hw(C, HW)
    assert tile_hw % 128 == 0, "tile_hw must be a multiple of 128"

    nt_blocks = -(-HW // tile_hw)          # blocks actually present (cdiv)
    # v7x has 2 TensorCores: if B == 1 the batch axis alone leaves one idle,
    # so split the pixel-reduction axis into 2 parallel halves and sum them
    # in the epilogue. (No-op on single-TC v5e/v6e.)
    ns = 2 if (B == 1 and nt_blocks >= 2) else 1
    nt_inner = -(-nt_blocks // ns)
    need_mask = (ns * nt_inner * tile_hw) != HW

    # Free reshapes only — no padding copy, no dtype copy of the big tensor.
    pred_r = pred.reshape(B, C, HW)
    label_r = label.reshape(B, 1, HW).astype(jnp.int32)

    kernel = functools.partial(
        _dsc_stats_kernel, hw_true=HW, tile_hw=tile_hw, nt_inner=nt_inner,
        need_mask=need_mask)

    last_blk = nt_blocks - 1

    def in_map(s, b, k):
        # clamp so a grid step that falls entirely past H*W re-reads the last
        # valid block (its contribution is zeroed by the in-kernel mask)
        return (b, 0, jnp.minimum(s * nt_inner + k, last_blk))

    grid_spec = pltpu.PrefetchScalarGridSpec(
        num_scalar_prefetch=0,
        grid=(ns, B, nt_inner),
        in_specs=[
            pl.BlockSpec((1, C, tile_hw), in_map),
            pl.BlockSpec((1, 1, tile_hw), in_map),
        ],
        out_specs=pl.BlockSpec((1, 1, C, 4), lambda s, b, k: (s, b, 0, 0)),
    )
    stats = pl.pallas_call(
        kernel,
        out_shape=jax.ShapeDtypeStruct((ns, B, C, 4), jnp.float32),
        grid_spec=grid_spec,
        compiler_params=pltpu.CompilerParams(
            dimension_semantics=("parallel", "parallel", "arbitrary"),
            vmem_limit_bytes=32 * 1024 * 1024),
    )(pred_r, label_r)

    stats = stats.sum(0)                                   # (B, C, 4)
    return stats[..., 0], stats[..., 1], stats[..., 2], stats[..., 3]


def dsc_loss(pred, label, num_classes, inter_weight=0.5, intra_weights=None,
             tile_hw=None):
    """Matches DSCLoss.forward: CE*(1-w) + Dice*w (2-D or 3-D spatial)."""
    B, C = pred.shape[0], pred.shape[1]
    assert C == num_classes
    n_pix = 1
    for d in pred.shape[2:]:
        n_pix *= int(d)

    inter, psum, tsum, ce = _dsc_stats(pred, label, tile_hw=tile_hw)

    # cross-entropy: plain mean over all pixels, or weighted mean as in
    # nn.CrossEntropyLoss(weight=intra_weights).
    if intra_weights is None:
        cel = jnp.sum(ce) / (B * n_pix)
    else:
        w = jnp.asarray(intra_weights, jnp.float32)
        cel = jnp.sum(ce.sum(0) * w) / jnp.sum(tsum.sum(0) * w)

    # dice loss, exactly as in the PyTorch module
    smooth = 1e-05
    dice = (2.0 * inter + smooth) / (psum + tsum + smooth)   # (B, C)
    dice_loss = 1.0 - dice.sum(0) / B                        # (C,)
    if intra_weights is not None:
        dicel = jnp.mean(dice_loss * jnp.asarray(intra_weights, jnp.float32))
    else:
        dicel = jnp.mean(dice_loss)

    return cel * (1.0 - inter_weight) + dicel * inter_weight


def _ref_dsc_loss(pred, label, num_classes, inter_weight=0.5,
                  intra_weights=None):
    """Pure-JAX reference matching the PyTorch semantics (for verification)."""
    logp = jax.nn.log_softmax(pred, axis=1)
    onehot = jnp.transpose(
        jax.nn.one_hot(label, num_classes, dtype=jnp.float32), (0, 3, 1, 2))
    ce_map = -jnp.sum(onehot * logp, axis=1)                 # (B, H, W)
    if intra_weights is None:
        cel = jnp.mean(ce_map)
    else:
        w = jnp.asarray(intra_weights, jnp.float32)
        wmap = w[label]
        cel = jnp.sum(wmap * ce_map) / jnp.sum(wmap)
    probs = jax.nn.softmax(pred, axis=1)
    B = pred.shape[0]
    p = probs.reshape(B, num_classes, -1)
    t = onehot.reshape(B, num_classes, -1)
    smooth = 1e-05
    dice = (2.0 * jnp.sum(p * t, axis=2) + smooth) / (
        jnp.sum(p, axis=2) + jnp.sum(t, axis=2) + smooth)
    dice_loss = 1.0 - dice.sum(0) / B
    if intra_weights is not None:
        dicel = jnp.mean(dice_loss * jnp.asarray(intra_weights, jnp.float32))
    else:
        dicel = jnp.mean(dice_loss)
    return cel * (1.0 - inter_weight) + dicel * inter_weight


if __name__ == "__main__":
    key = jax.random.PRNGKey(0)
    kp, kl, kp2, kl2 = jax.random.split(key, 4)

    # Case 1: default small shape, unweighted and class-weighted CE.
    B, C, H, W = 2, 4, 16, 16
    pred = jax.random.normal(kp, (B, C, H, W), dtype=jnp.float32)
    label = jax.random.randint(kl, (B, H, W), 0, C, dtype=jnp.int32)

    loss = dsc_loss(pred, label, num_classes=C, inter_weight=0.5)
    jax.block_until_ready(loss)
    ref = _ref_dsc_loss(pred, label, num_classes=C, inter_weight=0.5)
    np.testing.assert_allclose(np.asarray(loss), np.asarray(ref),
                               rtol=1e-5, atol=1e-5)

    weights = [0.1, 0.2, 0.3, 0.4]
    loss_w = dsc_loss(pred, label, num_classes=C, inter_weight=0.5,
                      intra_weights=weights)
    jax.block_until_ready(loss_w)
    ref_w = _ref_dsc_loss(pred, label, num_classes=C, inter_weight=0.5,
                          intra_weights=weights)
    np.testing.assert_allclose(np.asarray(loss_w), np.asarray(ref_w),
                               rtol=1e-5, atol=1e-5)

    # Case 2: B=1, spatial size not a multiple of 128, forced small tile so
    # the tiled-reduction, tail-mask (no-pad) and split-parallel (v7x) paths
    # are all exercised.
    B2, C2, H2, W2 = 1, 3, 20, 23
    pred2 = jax.random.normal(kp2, (B2, C2, H2, W2), dtype=jnp.float32)
    label2 = jax.random.randint(kl2, (B2, H2, W2), 0, C2, dtype=jnp.int32)
    loss2 = dsc_loss(pred2, label2, num_classes=C2, inter_weight=0.3,
                     tile_hw=128)
    jax.block_until_ready(loss2)
    ref2 = _ref_dsc_loss(pred2, label2, num_classes=C2, inter_weight=0.3)
    np.testing.assert_allclose(np.asarray(loss2), np.asarray(ref2),
                               rtol=1e-5, atol=1e-5)

    print("KERNEL_OK")
</pallas_src>

<mosaic_0001>
module attributes {stable_mosaic.version = 11 : i64} {
  func.func @_dsc_stats_kernel(%arg0: i32, %arg1: i32, %arg2: i32, %arg3: memref<1x4x256xf32, #tpu.memory_space<vmem>>, %arg4: memref<1x1x256xi32, #tpu.memory_space<vmem>>, %arg5: memref<1x1x4x4xf32, #tpu.memory_space<vmem>>) attributes {dimension_semantics = [#tpu.dimension_semantics<parallel>, #tpu.dimension_semantics<parallel>, #tpu.dimension_semantics<arbitrary>], iteration_bounds = array<i64: 1, 2, 1>, scalar_prefetch = 0 : i64, scratch_operands = 0 : i64, tpu.core_type = #tpu.core_type<tc>, window_params = [{transform_indices = @transform_0, window_bounds = array<i64: 1, 4, 256>}, {transform_indices = @transform_1, window_bounds = array<i64: 1, 1, 256>}, {transform_indices = @transform_2, window_bounds = array<i64: 1, 1, 4, 4>}]} {
    %c0_i32 = arith.constant 0 : i32
    %0 = arith.cmpi eq, %arg2, %c0_i32 : i32
    %1 = arith.extui %0 : i1 to i32
    %c0_i32_0 = arith.constant 0 : i32
    %2 = arith.cmpi ne, %1, %c0_i32_0 : i32
    scf.if %2 {
      %cst_20 = arith.constant 0.000000e+00 : f32
      %41 = vector.broadcast %cst_20 : f32 to vector<1x1x4x4xf32>
      %c0_21 = arith.constant 0 : index
      %c0_22 = arith.constant 0 : index
      %c0_23 = arith.constant 0 : index
      %c0_24 = arith.constant 0 : index
      %42 = vector.load %arg5[%c0_21, %c0_22, %c0_23, %c0_24] : memref<1x1x4x4xf32, #tpu.memory_space<vmem>>, vector<1x1x4x4xf32>
      tpu.vector_store %arg5[%c0_21, %c0_22, %c0_23, %c0_24], %41 {strides = array<i32>} : memref<1x1x4x4xf32, #tpu.memory_space<vmem>>, vector<1x1x4x4xf32>,
    } else {
    }
    %c0 = arith.constant 0 : index
    %c0_1 = arith.constant 0 : index
    %c0_2 = arith.constant 0 : index
    %3 = vector.load %arg3[%c0, %c0_1, %c0_2] : memref<1x4x256xf32, #tpu.memory_space<vmem>>, vector<1x4x256xf32>
    %4 = vector.shape_cast %3 : vector<1x4x256xf32> to vector<4x256xf32>
    %c0_3 = arith.constant 0 : index
    %c0_4 = arith.constant 0 : index
    %c0_5 = arith.constant 0 : index
    %5 = vector.load %arg4[%c0_3, %c0_4, %c0_5] : memref<1x1x256xi32, #tpu.memory_space<vmem>>, vector<1x1x256xi32>
    %6 = vector.shape_cast %5 : vector<1x1x256xi32> to vector<1x256xi32>
    %cst = arith.constant dense<0xFF800000> : vector<256xf32>
    %7 = vector.multi_reduction <maximumf>, %4, %cst [0] : vector<4x256xf32> to vector<256xf32>
    %8 = vector.shape_cast %7 : vector<256xf32> to vector<1x256xf32>
    %9 = vector.broadcast %8 : vector<1x256xf32> to vector<4x256xf32>
    %10 = arith.subf %4, %9 : vector<4x256xf32>
    %11 = math.exp %10 : vector<4x256xf32>
    %cst_6 = arith.constant dense<0.000000e+00> : vector<256xf32>
    %12 = vector.multi_reduction <add>, %11, %cst_6 [0] : vector<4x256xf32> to vector<256xf32>
    %13 = vector.shape_cast %12 : vector<256xf32> to vector<1x256xf32>
    %cst_7 = arith.constant 1.000000e+00 : f32
    %14 = vector.broadcast %cst_7 : f32 to vector<1x256xf32>
    %15 = arith.divf %14, %13 : vector<1x256xf32>
    %16 = vector.broadcast %15 : vector<1x256xf32> to vector<4x256xf32>
    %17 = arith.mulf %11, %16 : vector<4x256xf32>
    %18 = math.log %13 : vector<1x256xf32>
    %19 = tpu.iota {dimensions = array<i32: 0>} : vector<4x256xi32>
    %20 = vector.broadcast %6 : vector<1x256xi32> to vector<4x256xi32>
    %21 = arith.cmpi eq, %19, %20 : vector<4x256xi32>
    %22 = arith.extui %21 : vector<4x256xi1> to vector<4x256xi32>
    %23 = arith.sitofp %22 : vector<4x256xi32> to vector<4x256xf32>
    %24 = arith.mulf %17, %23 : vector<4x256xf32>
    %cst_8 = arith.constant dense<0.000000e+00> : vector<4xf32>
    %25 = vector.multi_reduction <add>, %24, %cst_8 [1] : vector<4x256xf32> to vector<4xf32>
    %26 = vector.shape_cast %25 : vector<4xf32> to vector<4x1xf32>
    %cst_9 = arith.constant dense<0.000000e+00> : vector<4xf32>
    %27 = vector.multi_reduction <add>, %17, %cst_9 [1] : vector<4x256xf32> to vector<4xf32>
    %28 = vector.shape_cast %27 : vector<4xf32> to vector<4x1xf32>
    %cst_10 = arith.constant dense<0.000000e+00> : vector<4xf32>
    %29 = vector.multi_reduction <add>, %23, %cst_10 [1] : vector<4x256xf32> to vector<4xf32>
    %30 = vector.shape_cast %29 : vector<4xf32> to vector<4x1xf32>
    %31 = vector.broadcast %18 : vector<1x256xf32> to vector<4x256xf32>
    %32 = arith.subf %31, %10 : vector<4x256xf32>
    %33 = arith.mulf %23, %32 : vector<4x256xf32>
    %cst_11 = arith.constant dense<0.000000e+00> : vector<4xf32>
    %34 = vector.multi_reduction <add>, %33, %cst_11 [1] : vector<4x256xf32> to vector<4xf32>
    %35 = vector.shape_cast %34 : vector<4xf32> to vector<4x1xf32>
    %36 = tpu.concatenate %26, %28, %30, %35 in 1 : vector<4x1xf32>, vector<4x1xf32>, vector<4x1xf32>, vector<4x1xf32> -> vector<4x4xf32>
    %c0_12 = arith.constant 0 : index
    %c0_13 = arith.constant 0 : index
    %c0_14 = arith.constant 0 : index
    %c0_15 = arith.constant 0 : index
    %37 = vector.load %arg5[%c0_12, %c0_13, %c0_14, %c0_15] : memref<1x1x4x4xf32, #tpu.memory_space<vmem>>, vector<1x1x4x4xf32>
    %38 = vector.shape_cast %36 : vector<4x4xf32> to vector<1x1x4x4xf32>
    %39 = arith.addf %37, %38 : vector<1x1x4x4xf32>
    %c0_16 = arith.constant 0 : index
    %c0_17 = arith.constant 0 : index
    %c0_18 = arith.constant 0 : index
    %c0_19 = arith.constant 0 : index
    %40 = vector.load %arg5[%c0_16, %c0_17, %c0_18, %c0_19] : memref<1x1x4x4xf32, #tpu.memory_space<vmem>>, vector<1x1x4x4xf32>
    tpu.vector_store %arg5[%c0_16, %c0_17, %c0_18, %c0_19], %39 {strides = array<i32>} : memref<1x1x4x4xf32, #tpu.memory_space<vmem>>, vector<1x1x4x4xf32>,
    return
  }
  func.func @transform_0(%arg0: i32, %arg1: i32, %arg2: i32) -> (i32, i32, i32) {
    %c1_i32 = arith.constant 1 : i32
    %0 = arith.muli %arg0, %c1_i32 : i32
    %1 = arith.addi %0, %arg2 : i32
    %c0_i32 = arith.constant 0 : i32
    %2 = arith.minsi %1, %c0_i32 : i32
    %c0_i32_0 = arith.constant 0 : i32
    %c0_i32_1 = arith.constant 0 : i32
    return %arg1, %c0_i32_0, %2 : i32, i32, i32
  }
  func.func @transform_1(%arg0: i32, %arg1: i32, %arg2: i32) -> (i32, i32, i32) {
    %c1_i32 = arith.constant 1 : i32
    %0 = arith.muli %arg0, %c1_i32 : i32
    %1 = arith.addi %0, %arg2 : i32
    %c0_i32 = arith.constant 0 : i32
    %2 = arith.minsi %1, %c0_i32 : i32
    %c0_i32_0 = arith.constant 0 : i32
    %c0_i32_1 = arith.constant 0 : i32
    return %arg1, %c0_i32_0, %2 : i32, i32, i32
  }
  func.func @transform_2(%arg0: i32, %arg1: i32, %arg2: i32) -> (i32, i32, i32, i32) {
    %c0_i32 = arith.constant 0 : i32
    %c0_i32_0 = arith.constant 0 : i32
    %c0_i32_1 = arith.constant 0 : i32
    return %arg0, %arg1, %c0_i32, %c0_i32_0 : i32, i32, i32, i32
  }
}

</mosaic_0001>

<llo_original>
// kernel: tpu_custom_call.1
$region0: #{tpu_custom_call.1}
  #allocation0 [shape = 'u32[]', space=smem, size = 0x4, offset = 0x4, fixed_abs, tag = 'smem constant byte address 0x4 - core index']
  #allocation1 [shape = 'u32[72,128]{1,0:T(1,128)}', space=vmem, size = 0x9000, scoped, tag = 'internal scratch']
  %s0 = inlined_call_operand.hbm [shape: f32[2,4,256], index: 0, kind: input, shape index: {}]
  %s1 = inlined_call_operand.hbm [shape: s32[2,1,256], index: 1, kind: input, shape index: {}]
  %s2 = inlined_call_operand.hbm [shape: f32[1,2,4,4], index: 2, kind: output, shape index: {}]
  %s3 = sld [smem:[#allocation0]]
  $region53: #{tpu_custom_call.1} parent=0
    _
  %s5 = ssub.s32 1, %s3
  %s6 = scalar_select 0, %s5, %s3
  $region1: #{tpu_custom_call.1} parent=0
    #allocation2 [shape = 'u8[8192]{0}', space=vmem, size = 0x2000, scoped, tag = 'input window, operand 0']
    #allocation3 [shape = 's32[2]{0}', space=sflag, size = 0x8, scoped, tag = 'scoped memory for tpu_custom_call.1']
    #allocation4 [shape = 's32[2]{0}', space=sflag, size = 0x8, scoped, tag = 'scoped memory for tpu_custom_call.1']
    #allocation5 [shape = 'u8[2048]{0}', space=vmem, size = 0x800, scoped, tag = 'input window, operand 1']
    #allocation6 [shape = 's32[2]{0}', space=sflag, size = 0x8, scoped, tag = 'scoped memory for tpu_custom_call.1']
    #allocation7 [shape = 'u8[4096]{0}', space=vmem, size = 0x1000, scoped, tag = 'output window, operand 0']
    %7 = vsyncpa [#allocation3], 0
    %s8 = scalar_lea.sflag [#allocation3], 1
    %9 = vsyncpa %s8, 0
    %10 = vsyncpa [#allocation6], 0
    %s11 = scalar_lea.sflag [#allocation6], 1
    %12 = vsyncpa %s11, 0
    %13 = vsyncpa [#allocation4], 0
    %s14 = scalar_lea.sflag [#allocation4], 1
    %15 = vsyncpa %s14, 0
    loop: start=0, step=1, limit=4
    $region2: #{tpu_custom_call.1} parent=1 // loop_pre_header
      _
    $region3: #{tpu_custom_call.1} parent=1 // loop_header
      %s17 = sphi 0, %s21
      %p18 = scmp.ge.s32.totalorder %s17, 4
      %s24 = sphi 0, %s43
      %s25 = sphi 0, %s39
      %s26 = sphi 0, %s35
      %s27 = sphi 0, %s24
      %s28 = sphi 0, %s25
      %s29 = sphi 0, %s26
      %s30 = sphi 0, %s27
      %s31 = sphi 0, %s28
      %s32 = sphi 0, %s29
      %s54 = sphi 0, %s56
      %s57 = sphi 0, %s54
      %s58 = sphi 0, %s57
      %s74 = sphi 0, %s58
      %s88 = sphi 0, %s90
      %s91 = sphi 0, %s88
      %s92 = sphi 0, %s91
      %s108 = sphi 0, %s92
      %s116 = sphi 0, %s118
      %s119 = sphi 0, %s116
      %s120 = sphi 0, %s119
      %s136 = sphi 0, %s120
    $region4: #{tpu_custom_call.1} parent=1 // loop_header_branch
      %20 = sbr.rel (%p18) target = $region8
    $region5: #{tpu_custom_call.1} parent=1 // loop_body
      %s22 = ssub.s32 %s17, 1
      %s23 = ssub.s32 %s17, 2
      %s33 = sadd.s32 1, %s26
      %p34 = scmp.ge.s32.totalorder %s33, 1
      %s35 = scalar_select %p34, 0, %s33
      %s36 = sadd.s32 1, %s25
      %s37 = scalar_select %p34, %s36, %s25
      %p38 = scmp.ge.s32.totalorder %s37, 2
      %s39 = scalar_select %p38, 0, %s37
      %s40 = sadd.s32 1, %s24
      %s41 = scalar_select %p38, %s40, %s24
      %p42 = scmp.ge.s32.totalorder %s41, 1
      %s43 = scalar_select %p42, 0, %s41
      %s44 = sadd.s32 %s24, %s26
      %p45 = scmp.lt.s32.totalorder %s44, 0
      %s46 = scalar_select %p45, %s44, 0
      %s47 = sadd.s32 %s43, %s35
      %p48 = scmp.lt.s32.totalorder %s47, 0
      %s49 = scalar_select %p48, %s47, 0
      %s50 = ssub.s32 %s25, %s39
      %s51 = ssub.s32 %s46, %s49
      %s52 = sor.u32 %s50, %s51
      %p53 = scmp.eq.s32.totalorder %s52, 0
      %s55 = sadd.s32 %s54, 1
      %s56 = scalar_select %p53, %s54, %s55
      %p59 = pneg %p53
      %p60 = scmp.eq.s32.totalorder %s17, 1
      %p61 = por %p59, %p60
      %p62 = scmp.ne.s32.totalorder %s54, %s57
      %p63 = scmp.eq.s32.totalorder %s17, 0
      %p64 = por %p62, %p63
      %p65 = scmp.ne.s32.totalorder %s54, %s57
      %p66 = scmp.eq.s32.totalorder %s22, 1
      %p67 = por %p65, %p66
      %p68 = scmp.ne.s32.totalorder %s57, %s58
      %p69 = scmp.eq.s32.totalorder %s22, 0
      %p70 = por %p68, %p69
      %p71 = scmp.ne.s32.totalorder %s57, %s58
      %p72 = scmp.eq.s32.totalorder %s23, 1
      %p73 = por %p71, %p72
      %p75 = scmp.ne.s32.totalorder %s58, %s74
      %p76 = scmp.eq.s32.totalorder %s23, 0
      %p77 = por %p75, %p76
      %s78 = sadd.s32 %s24, %s26
      %p79 = scmp.lt.s32.totalorder %s78, 0
      %s80 = scalar_select %p79, %s78, 0
      %s81 = sadd.s32 %s43, %s35
      %p82 = scmp.lt.s32.totalorder %s81, 0
      %s83 = scalar_select %p82, %s81, 0
      %s84 = ssub.s32 %s25, %s39
      %s85 = ssub.s32 %s80, %s83
      %s86 = sor.u32 %s84, %s85
      %p87 = scmp.eq.s32.totalorder %s86, 0
      %s89 = sadd.s32 %s88, 1
      %s90 = scalar_select %p87, %s88, %s89
      %p93 = pneg %p87
      %p94 = scmp.eq.s32.totalorder %s17, 1
      %p95 = por %p93, %p94
      %p96 = scmp.ne.s32.totalorder %s88, %s91
      %p97 = scmp.eq.s32.totalorder %s17, 0
      %p98 = por %p96, %p97
      %p99 = scmp.ne.s32.totalorder %s88, %s91
      %p100 = scmp.eq.s32.totalorder %s22, 1
      %p101 = por %p99, %p100
      %p102 = scmp.ne.s32.totalorder %s91, %s92
      %p103 = scmp.eq.s32.totalorder %s22, 0
      %p104 = por %p102, %p103
      %p105 = scmp.ne.s32.totalorder %s91, %s92
      %p106 = scmp.eq.s32.totalorder %s23, 1
      %p107 = por %p105, %p106
      %p109 = scmp.ne.s32.totalorder %s92, %s108
      %p110 = scmp.eq.s32.totalorder %s23, 0
      %p111 = por %p109, %p110
      %s112 = ssub.s32 %s24, %s43
      %s113 = ssub.s32 %s25, %s39
      %s114 = sor.u32 %s112, %s113
      %p115 = scmp.eq.s32.totalorder %s114, 0
      %s117 = sadd.s32 %s116, 1
      %s118 = scalar_select %p115, %s116, %s117
      %p121 = pneg %p115
      %p122 = scmp.eq.s32.totalorder %s17, 1
      %p123 = por %p121, %p122
      %p124 = scmp.ne.s32.totalorder %s116, %s119
      %p125 = scmp.eq.s32.totalorder %s17, 0
      %p126 = por %p124, %p125
      %p127 = scmp.ne.s32.totalorder %s116, %s119
      %p128 = scmp.eq.s32.totalorder %s22, 1
      %p129 = por %p127, %p128
      %p130 = scmp.ne.s32.totalorder %s119, %s120
      %p131 = scmp.eq.s32.totalorder %s22, 0
      %p132 = por %p130, %p131
      %p133 = scmp.ne.s32.totalorder %s119, %s120
      %p134 = scmp.eq.s32.totalorder %s23, 1
      %p135 = por %p133, %p134
      %p137 = scmp.ne.s32.totalorder %s120, %s136
      %p138 = scmp.eq.s32.totalorder %s23, 0
      %p139 = por %p137, %p138
      %p140 = scmp.le.s32.totalorder 1, %s17
      %p141 = scmp.lt.s32.totalorder %s17, 3
      %p142 = pnand %p140, %p141
      %p143 = pneg %p142
      // Predicated region
      $region9: #{tpu_custom_call.1} parent=5 // pred_check
        _
      $region10: #{tpu_custom_call.1} parent=5 // pred_check_branch
        %145 = sbr.rel (%p142) target = $region12
      $region11: #{tpu_custom_call.1} parent=5 // pred_region
        %s146 = ssub.s32 %s17, 1
      $region12: #{tpu_custom_call.1} parent=5 // pred_fallthru
        _
      %p147 = scmp.lt.s32.totalorder %s17, 2
      // Predicated region
      $region13: #{tpu_custom_call.1} parent=5 // pred_check
        %p148 = pneg %p147
      $region14: #{tpu_custom_call.1} parent=5 // pred_check_branch
        %150 = sbr.rel (%p148) target = $region16
      $region15: #{tpu_custom_call.1} parent=5 // pred_region
        // Predicated region
        $region17: #{tpu_custom_call.1} parent=15 // pred_check
          %p151 = pneg %p64
        $region18: #{tpu_custom_call.1} parent=15 // pred_check_branch
          %153 = sbr.rel (%p151) target = $region20
        $region19: #{tpu_custom_call.1} parent=15 // pred_region
          %s154 = sand.u32 %s54, 1
          %s155 = scalar_lea.sflag [#allocation3], %s154
          %s156 = sand.u32 %s54, 1
          %s157 = smul.addr %s156, 8
          %s158 = scalar_lea.vmem [#allocation2], %s157
          %s159 = sadd.s32 %s24, %s26
          %p160 = scmp.lt.s32.totalorder %s159, 0
          %s161 = scalar_select %p160, %s159, 0
          %s162 = smul.u32 2, %s161
          %164 = vsyncadd %s155, 0
          %s165 = smul.addr %s25, 2
          %s166 = sadd.s32 %s162, %s165
          %s167 = smul.addr %s166, 4
          %s168 = scalar_lea.hbm %s0, %s167
          %s170 = sshll.u32 %s168, 4
          %s171 = int_to_ptr.hbm [resolvable:$true] %s170
          %s172 = sshll.u32 %s158, 4
          %s173 = int_to_ptr.vmem [resolvable:$true] %s172
          %175 = dma.hbm_to_vmem [thread:$0]  %s171, 128, %s173, %s155
        $region20: #{tpu_custom_call.1} parent=15 // pred_fallthru
          _
        // Predicated region
        $region21: #{tpu_custom_call.1} parent=15 // pred_check
          %p176 = pneg %p98
        $region22: #{tpu_custom_call.1} parent=15 // pred_check_branch
          %178 = sbr.rel (%p176) target = $region24
        $region23: #{tpu_custom_call.1} parent=15 // pred_region
          %s179 = sand.u32 %s88, 1
          %s180 = scalar_lea.sflag [#allocation6], %s179
          %s181 = sand.u32 %s88, 1
          %s182 = smul.addr %s181, 2
          %s183 = scalar_lea.vmem [#allocation5], %s182
          %s184 = sadd.s32 %s24, %s26
          %p185 = scmp.lt.s32.totalorder %s184, 0
          %s186 = scalar_select %p185, %s184, 0
          %s187 = smul.u32 2, %s186
          %189 = vsyncadd %s180, 0
          %s190 = smul.addr %s25, 2
          %s191 = sadd.s32 %s187, %s190
          %s192 = scalar_lea.hbm %s1, %s191
          %s194 = sshll.u32 %s192, 4
          %s195 = int_to_ptr.hbm [resolvable:$true] %s194
          %s196 = sshll.u32 %s183, 4
          %s197 = int_to_ptr.vmem [resolvable:$true] %s196
          %199 = dma.hbm_to_vmem [thread:$0]  %s195, 32, %s197, %s180
        $region24: #{tpu_custom_call.1} parent=15 // pred_fallthru
          _
      $region16: #{tpu_custom_call.1} parent=5 // pred_fallthru
        _
      %p200 = scmp.le.s32.totalorder 1, %s17
      %p201 = scmp.lt.s32.totalorder %s17, 3
      %p202 = pnand %p200, %p201
      %p203 = pneg %p202
      // Predicated region
      $region25: #{tpu_custom_call.1} parent=5 // pred_check
        _
      $region26: #{tpu_custom_call.1} parent=5 // pred_check_branch
        %205 = sbr.rel (%p202) target = $region28
      $region27: #{tpu_custom_call.1} parent=5 // pred_region
        %s206 = ssub.s32 %s17, 1
        %s207 = sand.u32 %s57, 1
        %s208 = scalar_lea.sflag [#allocation3], %s207
        %s209 = sand.u32 %s57, 1
        %s210 = smul.addr %s209, 8
        %s211 = scalar_lea.vmem [#allocation2], %s210
        // Predicated region
        $region29: #{tpu_custom_call.1} parent=27 // pred_check
          %p212 = pneg %p70
        $region30: #{tpu_custom_call.1} parent=27 // pred_check_branch
          %214 = sbr.rel (%p212) target = $region32
        $region31: #{tpu_custom_call.1} parent=27 // pred_region
          %216 = dma.done %s208, 128
        $region32: #{tpu_custom_call.1} parent=27 // pred_fallthru
          _
        %s217 = sand.u32 %s91, 1
        %s218 = scalar_lea.sflag [#allocation6], %s217
        %s219 = sand.u32 %s91, 1
        %s220 = smul.addr %s219, 2
        %s221 = scalar_lea.vmem [#allocation5], %s220
        // Predicated region
        $region33: #{tpu_custom_call.1} parent=27 // pred_check
          %p222 = pneg %p104
        $region34: #{tpu_custom_call.1} parent=27 // pred_check_branch
          %224 = sbr.rel (%p222) target = $region36
        $region35: #{tpu_custom_call.1} parent=27 // pred_region
          %226 = dma.done %s218, 32
        $region36: #{tpu_custom_call.1} parent=27 // pred_fallthru
          _
        %s227 = sand.u32 %s57, 1
        %s228 = scalar_lea.sflag [#allocation3], %s227
        %s229 = sand.u32 %s57, 1
        %s230 = smul.addr %s229, 8
        %s231 = scalar_lea.vmem [#allocation2], %s230
        %p232 = pneg %p70
        %p233 = pneg %p67
        %s234 = sand.u32 %s91, 1
        %s235 = scalar_lea.sflag [#allocation6], %s234
        %s236 = sand.u32 %s91, 1
        %s237 = smul.addr %s236, 2
        %s238 = scalar_lea.vmem [#allocation5], %s237
        %p239 = pneg %p104
        %p240 = pneg %p101
        %p241 = pneg %p132
        %p242 = pneg %p129
        %s243 = sand.u32 %s119, 1
        %s244 = scalar_lea.sflag [#allocation4], %s243
        %s245 = sand.u32 %s119, 1
        %s246 = smul.addr %s245, 4
        %s247 = scalar_lea.vmem [#allocation7], %s246
        %s248 = sadd.s32 %s27, %s29
        %p249 = scmp.lt.s32.totalorder %s248, 0
        %s250 = scalar_select %p249, %s248, 0
        %s251 = smul.u32 2, %s250
        %s252 = sadd.s32 %s27, %s29
        %p253 = scmp.lt.s32.totalorder %s252, 0
        %s254 = scalar_select %p253, %s252, 0
        %s255 = smul.u32 2, %s254
        %p256 = scmp.eq.s32.totalorder %s29, 0
        // Predicated region
        $region37: #{tpu_custom_call.1} parent=27 // pred_check
          %p257 = pneg %p256
        $region38: #{tpu_custom_call.1} parent=27 // pred_check_branch
          %259 = sbr.rel (%p257) target = $region40
        $region39: #{tpu_custom_call.1} parent=27 // pred_region
          %vm260 = vcmask 27648
          %261 = vst.msk [vmem:[%s247] sm:$0xf] %vm260, 0.0
        $region40: #{tpu_custom_call.1} parent=27 // pred_fallthru
          _
        %v262 = vld [vmem:[%s211] sm:$0xff]
        %v263 = vld [vmem:[%s221] sm:$0x3]
        %265 = vst [vmem:[#allocation1] ss:$2 sm:$0xff] %v262
        %v266 = vld.sshfl [vmem:[#allocation1] sm:$0xff pattern:$0x75316420]
        %v267 = vld.sshfl [vmem:[#allocation1 + $0x8] sm:$0xff pattern:$0x75316420]
        %vm270 = vcmask 1043456
        %v271 = vsel %vm270, %v266, -inf
        %v272 = vrot.slane %v271, 4
        %v273 = vmax.f32 %v271, %v272
        %v274 = vrot.slane %v273, 2
        %v275 = vmax.f32 %v273, %v274
        %v276 = vrot.slane %v275, 1
        %v277 = vmax.f32 %v275, %v276
        %v278 = vsel %vm270, %v267, -inf
        %v279 = vrot.slane %v278, 4
        %v280 = vmax.f32 %v278, %v279
        %v281 = vrot.slane %v280, 2
        %v282 = vmax.f32 %v280, %v281
        %v283 = vrot.slane %v282, 1
        %v284 = vmax.f32 %v282, %v283
        %v287 = vrot.slane %v284, 4
        %v288 = vsel %vm270, %v277, %v287
        %v290 = vsub.f32 %v262, %v288
        %v291 = vmul.f32 %v290, 1.442695
        %v292 = vpow.pop %v291
        %294 = vst [vmem:[#allocation1] ss:$2 sm:$0xff] %v292
        %v295 = vld.sshfl [vmem:[#allocation1] sm:$0xff pattern:$0x75316420]
        %v296 = vld.sshfl [vmem:[#allocation1 + $0x8] sm:$0xff pattern:$0x75316420]
        %v299 = vsel %vm270, %v295, 0.0
        %v300 = vrot.slane %v299, 4
        %v301 = vadd.f32 %v299, %v300
        %v302 = vrot.slane %v301, 2
        %v303 = vadd.f32 %v301, %v302
        %v304 = vrot.slane %v303, 1
        %v305 = vadd.f32 %v303, %v304
        %v306 = vsel %vm270, %v296, 0.0
        %v307 = vrot.slane %v306, 4
        %v308 = vadd.f32 %v306, %v307
        %v309 = vrot.slane %v308, 2
        %v310 = vadd.f32 %v308, %v309
        %v311 = vrot.slane %v310, 1
        %v312 = vadd.f32 %v310, %v311
        %v313 = vrcp.pop %v305
        %v314 = vmul.f32 %v305, %v313
        %v315 = vsub.f32 1.0, %v314
        %v316 = vmul.f32 %v313, %v315
        %v317 = vadd.f32 %v313, %v316
        %vm318 = vweird.f32 %v305
        %vm319 = vweird.f32 %v313
        %vm320 = vmor %vm318, %vm319
        %v321 = vsel %vm320, %v313, %v317
        %v322 = vand.u32 2147483647, %v305
        %vm323 = vcmp.eq.f32.partialorder %v322, 8.507059e+37
        %v324 = vand.u32 %v305, 2147483648
        %v325 = vor.u32 1.1754944e-38, %v324
        %v326 = vsel %vm323, %v325, %v321
        %v327 = vmul.f32 1.0, %v326
        %v328 = vrcp.pop %v312
        %v329 = vmul.f32 %v312, %v328
        %v330 = vsub.f32 1.0, %v329
        %v331 = vmul.f32 %v328, %v330
        %v332 = vadd.f32 %v328, %v331
        %vm333 = vweird.f32 %v312
        %vm334 = vweird.f32 %v328
        %vm335 = vmor %vm333, %vm334
        %v336 = vsel %vm335, %v328, %v332
        %v337 = vand.u32 2147483647, %v312
        %vm338 = vcmp.eq.f32.partialorder %v337, 8.507059e+37
        %v339 = vand.u32 %v312, 2147483648
        %v340 = vor.u32 1.1754944e-38, %v339
        %v341 = vsel %vm338, %v340, %v336
        %v342 = vmul.f32 1.0, %v341
        %v345 = vrot.slane %v342, 4
        %v346 = vsel %vm270, %v327, %v345
        %v348 = vmul.f32 %v292, %v346
        %v349 = vlog2.pop %v305
        %v350 = vmul.f32 %v349, 0.6931472
        %v351 = vlog2.pop %v312
        %v352 = vmul.f32 %v351, 0.6931472
        %v353 = vlaneseq
        %v354 = vshrl.u32 %v353, 7
        %v355 = vperm.slane %v263, 0
        %v356 = vperm.slane %v263, 1
        %vm357 = vcmp.eq.s32.totalorder %v354, %v355
        %vm358 = vcmp.eq.s32.totalorder %v354, %v356
        %v359 = vsel %vm357, 1, 0
        %v360 = vsel %vm358, 1, 0
        %v361 = vcvt.s32.f32 %v359
        %v362 = vcvt.s32.f32 %v360
        %v365 = vrot.slane %v362, 4
        %v366 = vsel %vm270, %v361, %v365
        %v368 = vmul.f32 %v348, %v366
        %370 = vst [vmem:[#allocation1] ss:$2 sm:$0xff] %v368
        %v371 = vld.sshfl [vmem:[#allocation1] sm:$0xff pattern:$0x75316420]
        %v372 = vld.sshfl [vmem:[#allocation1 + $0x8] sm:$0xff pattern:$0x75316420]
        %v375 = vsel %vm270, %v371, 0.0
        %v376 = vsel %vm270, %v372, 0.0
        %v377 = vadd.f32 %v375, %v376
        %378 = vadd.xlane.f32.xlu0 %v377
        %v379 = vpop.xlane.xlu0 %378
        %381 = vst [vmem:[#allocation1] ss:$2 sm:$0xff] %v348
        %v382 = vld.sshfl [vmem:[#allocation1] sm:$0xff pattern:$0x75316420]
        %v383 = vld.sshfl [vmem:[#allocation1 + $0x8] sm:$0xff pattern:$0x75316420]
        %v386 = vsel %vm270, %v382, 0.0
        %v387 = vsel %vm270, %v383, 0.0
        %v388 = vadd.f32 %v386, %v387
        %389 = vadd.xlane.f32.xlu0 %v388
        %v390 = vpop.xlane.xlu0 %389
        %v391 = vsel %vm270, %v361, 0.0
        %v392 = vsel %vm270, %v362, 0.0
        %v393 = vadd.f32 %v391, %v392
        %394 = vadd.xlane.f32.xlu0 %v393
        %v395 = vpop.xlane.xlu0 %394
        %397 = vst [vmem:[#allocation1] ss:$2 sm:$0xff] %v290
        %v398 = vld.sshfl [vmem:[#allocation1] sm:$0xff pattern:$0x75316420]
        %v399 = vld.sshfl [vmem:[#allocation1 + $0x8] sm:$0xff pattern:$0x75316420]
        %v402 = vsub.f32 %v350, %v398
        %v403 = vsub.f32 %v352, %v399
        %v404 = vmul.f32 %v361, %v402
        %v405 = vmul.f32 %v362, %v403
        %v406 = vsel %vm270, %v404, 0.0
        %v407 = vsel %vm270, %v405, 0.0
        %v408 = vadd.f32 %v406, %v407
        %409 = vadd.xlane.f32.xlu0 %v408
        %v410 = vpop.xlane.xlu0 %409
        %vm411 = vcmask 7168
        %v412 = vsel %vm411, %v379, %v390
        %vm413 = vcmask 15360
        %v414 = vsel %vm413, %v412, %v395
        %vm415 = vcmask 23552
        %v416 = vsel %vm415, %v414, %v410
        %v417 = vld [vmem:[%s247] sm:$0xf]
        %v418 = vadd.f32 %v417, %v416
        %vm419 = vcmask 27648
        %420 = vst.msk [vmem:[%s247] sm:$0xf] %vm419, %v418
        %s421 = sand.u32 %s119, 1
        %s422 = scalar_lea.sflag [#allocation4], %s421
        %s423 = sand.u32 %s119, 1
        %s424 = smul.addr %s423, 4
        %s425 = scalar_lea.vmem [#allocation7], %s424
        // Predicated region
        $region41: #{tpu_custom_call.1} parent=27 // pred_check
          %p426 = pneg %p129
        $region42: #{tpu_custom_call.1} parent=27 // pred_check_branch
          %428 = sbr.rel (%p426) target = $region44
        $region43: #{tpu_custom_call.1} parent=27 // pred_region
          %430 = vsyncadd %s422, 0
          %s431 = smul.addr %s27, 2
          %s432 = sadd.s32 %s28, %s431
          %s433 = smul.addr %s432, 4
          %s434 = scalar_lea.hbm %s2, %s433
          %s436 = sshll.u32 %s425, 4
          %s437 = int_to_ptr.vmem [resolvable:$true] %s436
          %s438 = sshll.u32 %s434, 4
          %s439 = int_to_ptr.hbm [resolvable:$true] %s438
          %441 = dma.vmem_to_hbm [thread:$0]  %s437, 64, %s439, %s422
        $region44: #{tpu_custom_call.1} parent=27 // pred_fallthru
          _
      $region28: #{tpu_custom_call.1} parent=5 // pred_fallthru
        _
      %p442 = scmp.le.s32.totalorder 2, %s17
      // Predicated region
      $region45: #{tpu_custom_call.1} parent=5 // pred_check
        %p443 = pneg %p442
      $region46: #{tpu_custom_call.1} parent=5 // pred_check_branch
        %445 = sbr.rel (%p443) target = $region48
      $region47: #{tpu_custom_call.1} parent=5 // pred_region
        %s446 = ssub.s32 %s17, 2
        // Predicated region
        $region49: #{tpu_custom_call.1} parent=47 // pred_check
          %p447 = pneg %p135
        $region50: #{tpu_custom_call.1} parent=47 // pred_check_branch
          %449 = sbr.rel (%p447) target = $region52
        $region51: #{tpu_custom_call.1} parent=47 // pred_region
          %s450 = sand.u32 %s120, 1
          %s451 = scalar_lea.sflag [#allocation4], %s450
          %s452 = sand.u32 %s120, 1
          %s453 = smul.addr %s452, 4
          %s454 = scalar_lea.vmem [#allocation7], %s453
          %456 = dma.done %s451, 64
        $region52: #{tpu_custom_call.1} parent=47 // pred_fallthru
          _
      $region48: #{tpu_custom_call.1} parent=5 // pred_fallthru
        _
    $region6: #{tpu_custom_call.1} parent=1 // loop_footer
      %s21 = sadd.s32 1, %s17
    $region7: #{tpu_custom_call.1} parent=1 // loop_footer_branch
      %16 = sbr.rel target = $region3
    $region8: #{tpu_custom_call.1} parent=1 // loop_exit
      _
    %457 = vsyncpa [#allocation3], 1
    %s458 = scalar_lea.sflag [#allocation3], 1
    %459 = vsyncpa %s458, 1
    %460 = vsyncpa [#allocation6], 1
    %s461 = scalar_lea.sflag [#allocation6], 1
    %462 = vsyncpa %s461, 1
    %463 = vsyncpa [#allocation4], 1
    %s464 = scalar_lea.sflag [#allocation4], 1
    %465 = vsyncpa %s464, 1

</llo_original>
